<compile_context>
chip_gen: v7x
topology: tpu7x:2x2x1
jax: 0.10.0
libtpu: 0.0.40
codegen_flags: <defaults>
</compile_context>

<pallas_src>
import math
import numpy as np
import jax
import jax.numpy as jnp
from jax.experimental import pallas as pl
from jax.experimental.pallas import tpu as pltpu

LANE = 128           # TPU lane width (last dim)
MAX_ROW_TILE = 1024  # 1024*128*4B = 512 KiB per f32 buffer; 2 inputs x 2 bufs = 2 MiB VMEM


def _make_sumsq_kernel(row_tile, k_inner, rows_valid, need_mask):
    """Build a kernel that accumulates sum((pred-target)^2) into a resident (8,128) acc."""

    def kernel(pred_ref, tgt_ref, out_ref):
        ki = pl.program_id(2)

        @pl.when(ki == 0)
        def _():
            out_ref[...] = jnp.zeros_like(out_ref)

        # Cast inside the kernel only (inputs DMA'd in their native dtype).
        p = pred_ref[0].astype(jnp.float32)      # (row_tile, LANE)
        t = tgt_ref[0].astype(jnp.float32)
        d = p - t
        dd = d * d

        if need_mask:
            # Zero the contribution of rows past the real extent (ragged last tile);
            # also neutralizes any garbage read from the padded part of the block.
            ko = pl.program_id(1)
            base = (ko * k_inner + ki) * row_tile
            rows = jax.lax.broadcasted_iota(jnp.int32, (row_tile, LANE), 0) + base
            dd = jnp.where(rows < rows_valid, dd, 0.0)

        # Fold row_tile rows into an (8, LANE) partial: pure VALU vreg adds (no XLU).
        partial = dd.reshape(row_tile // 8, 8, LANE).sum(axis=0)
        out_ref[...] = out_ref[...] + partial[None, None, :, :]

    return kernel


def _per_sample_sumsq(pred3, tgt3):
    """pred3/tgt3: (B, R, 128) in native dtype -> (B,) f32 sum of squared error."""
    B, R, _ = pred3.shape
    row_tile = min(MAX_ROW_TILE, ((R + 7) // 8) * 8)
    K = pl.cdiv(R, row_tile)
    # Give v7x's second TensorCore work when B == 1 by splitting the reduction axis
    # into an outer "parallel" axis (only when it splits evenly -> no fully-OOB blocks).
    KO = 2 if (B == 1 and K >= 2 and K % 2 == 0) else 1
    KI = K // KO
    need_mask = (R % row_tile) != 0

    kernel = _make_sumsq_kernel(row_tile, KI, R, need_mask)

    partials = pl.pallas_call(
        kernel,
        out_shape=jax.ShapeDtypeStruct((B, KO, 8, LANE), jnp.float32),
        grid_spec=pltpu.PrefetchScalarGridSpec(
            num_scalar_prefetch=0,
            grid=(B, KO, KI),
            in_specs=[
                pl.BlockSpec((1, row_tile, LANE), lambda b, ko, ki: (b, ko * KI + ki, 0)),
                pl.BlockSpec((1, row_tile, LANE), lambda b, ko, ki: (b, ko * KI + ki, 0)),
            ],
            out_specs=pl.BlockSpec((1, 1, 8, LANE), lambda b, ko, ki: (b, ko, 0, 0)),
        ),
        compiler_params=pltpu.CompilerParams(
            dimension_semantics=("parallel", "parallel", "arbitrary")),
    )(pred3, tgt3)

    # Tiny (B, KO, 8, 128) reduce in JAX (one XLU-ish reduce per sample total).
    return partials.sum(axis=(1, 2, 3))


def psnr_loss(pred, target, loss_weight=1.0, toY=False):
    scale = 10.0 / math.log(10.0)

    if toY:
        # TODO(synk): BT.601 RGB->Y conversion kept as JAX glue; fuse into the kernel
        # (per-tile VPU weighted sum) if toY=True becomes a hot path.
        coef = jnp.array([65.481, 128.553, 24.966], dtype=pred.dtype).reshape(1, 1, 3, 1, 1)
        pred = (pred * 255.0 * coef).sum(axis=2, keepdims=True) + 16.0
        target = (target * 255.0 * coef).sum(axis=2, keepdims=True) + 16.0
        pred, target = pred / 255.0, target / 255.0

    B = pred.shape[0]
    M = int(np.prod(pred.shape[1:]))

    # Flatten each sample (free, contiguous reshape). Only pad to the 128-lane width
    # when M is not already a multiple of 128 (no dtype cast, no chunk-sized pad, so
    # typical image shapes incur zero extra HBM traffic before the kernel).
    pf = pred.reshape(B, M)
    tf = target.reshape(B, M)
    pad = (-M) % LANE
    if pad:
        pf = jnp.pad(pf, ((0, 0), (0, pad)))   # equal zero-pad on both -> diff is 0
        tf = jnp.pad(tf, ((0, 0), (0, pad)))
    R = (M + pad) // LANE
    pf = pf.reshape(B, R, LANE)
    tf = tf.reshape(B, R, LANE)

    sums = _per_sample_sumsq(pf, tf)           # (B,) sum of squared error
    mse = sums / jnp.float32(M)                # mean over dims (1,2,3,4)
    return loss_weight * scale * jnp.mean(jnp.log(mse + 1e-8))


def _psnr_loss_ref(pred, target, loss_weight=1.0, toY=False):
    scale = 10.0 / math.log(10.0)
    if toY:
        coef = jnp.array([65.481, 128.553, 24.966], dtype=pred.dtype).reshape(1, 1, 3, 1, 1)
        pred = (pred * 255.0 * coef).sum(axis=2, keepdims=True) + 16.0
        target = (target * 255.0 * coef).sum(axis=2, keepdims=True) + 16.0
        pred, target = pred / 255.0, target / 255.0
    mse = jnp.mean((pred - target) ** 2, axis=(1, 2, 3, 4))
    return loss_weight * scale * jnp.mean(jnp.log(mse + 1e-8))


if __name__ == "__main__":
    key = jax.random.PRNGKey(0)
    k1, k2, k3, k4, k5, k6 = jax.random.split(key, 6)

    # Default module config: (batch, frames, channels, H, W), loss_weight=1, toY=False.
    pred = jax.random.uniform(k1, (2, 3, 3, 16, 16), dtype=jnp.float32)
    target = jax.random.uniform(k2, (2, 3, 3, 16, 16), dtype=jnp.float32)
    out = jax.block_until_ready(psnr_loss(pred, target, loss_weight=1.0, toY=False))
    ref = _psnr_loss_ref(pred, target, loss_weight=1.0, toY=False)
    np.testing.assert_allclose(np.asarray(out), np.asarray(ref), rtol=1e-5, atol=1e-5)

    # toY branch (RGB->Y glue + same kernel reduction).
    out_y = jax.block_until_ready(psnr_loss(pred, target, loss_weight=1.0, toY=True))
    ref_y = _psnr_loss_ref(pred, target, loss_weight=1.0, toY=True)
    np.testing.assert_allclose(np.asarray(out_y), np.asarray(ref_y), rtol=1e-5, atol=1e-5)

    # B == 1, multi-tile sample: exercises the (parallel KO, arbitrary KI) reduction
    # split and the ragged-row in-kernel mask.
    pred1 = jax.random.uniform(k3, (1, 3, 3, 128, 128), dtype=jnp.float32)
    target1 = jax.random.uniform(k4, (1, 3, 3, 128, 128), dtype=jnp.float32)
    out1 = jax.block_until_ready(psnr_loss(pred1, target1))
    ref1 = _psnr_loss_ref(pred1, target1)
    np.testing.assert_allclose(np.asarray(out1), np.asarray(ref1), rtol=1e-5, atol=1e-5)

    # Non-lane-aligned per-sample size: exercises the minimal pad-to-128 path.
    pred2 = jax.random.uniform(k5, (2, 1, 3, 10, 10), dtype=jnp.float32)
    target2 = jax.random.uniform(k6, (2, 1, 3, 10, 10), dtype=jnp.float32)
    out2 = jax.block_until_ready(psnr_loss(pred2, target2))
    ref2 = _psnr_loss_ref(pred2, target2)
    np.testing.assert_allclose(np.asarray(out2), np.asarray(ref2), rtol=1e-5, atol=1e-5)

    print("KERNEL_OK")
</pallas_src>

<mosaic_0001>
module attributes {stable_mosaic.version = 11 : i64} {
  func.func @kernel(%arg0: i32, %arg1: i32, %arg2: i32, %arg3: memref<1x24x128xf32, #tpu.memory_space<vmem>>, %arg4: memref<1x24x128xf32, #tpu.memory_space<vmem>>, %arg5: memref<1x1x8x128xf32, #tpu.memory_space<vmem>>) attributes {dimension_semantics = [#tpu.dimension_semantics<parallel>, #tpu.dimension_semantics<parallel>, #tpu.dimension_semantics<arbitrary>], iteration_bounds = array<i64: 2, 1, 1>, scalar_prefetch = 0 : i64, scratch_operands = 0 : i64, tpu.core_type = #tpu.core_type<tc>, window_params = [{transform_indices = @transform_0, window_bounds = array<i64: 1, 24, 128>}, {transform_indices = @transform_1, window_bounds = array<i64: 1, 24, 128>}, {transform_indices = @transform_2, window_bounds = array<i64: 1, 1, 8, 128>}]} {
    %c0_i32 = arith.constant 0 : i32
    %0 = arith.cmpi eq, %arg2, %c0_i32 : i32
    %1 = arith.extui %0 : i1 to i32
    %c0_i32_0 = arith.constant 0 : i32
    %2 = arith.cmpi ne, %1, %c0_i32_0 : i32
    scf.if %2 {
      %cst_15 = arith.constant 0.000000e+00 : f32
      %25 = vector.broadcast %cst_15 : f32 to vector<1x1x8x128xf32>
      %c0_16 = arith.constant 0 : index
      %c0_17 = arith.constant 0 : index
      %c0_18 = arith.constant 0 : index
      %c0_19 = arith.constant 0 : index
      %26 = vector.load %arg5[%c0_16, %c0_17, %c0_18, %c0_19] : memref<1x1x8x128xf32, #tpu.memory_space<vmem>>, vector<1x1x8x128xf32>
      tpu.vector_store %arg5[%c0_16, %c0_17, %c0_18, %c0_19], %25 {strides = array<i32>} : memref<1x1x8x128xf32, #tpu.memory_space<vmem>>, vector<1x1x8x128xf32>,
    } else {
    }
    %c0 = arith.constant 0 : index
    %c0_1 = arith.constant 0 : index
    %c0_2 = arith.constant 0 : index
    %3 = vector.load %arg3[%c0, %c0_1, %c0_2] : memref<1x24x128xf32, #tpu.memory_space<vmem>>, vector<1x24x128xf32>
    %4 = vector.shape_cast %3 : vector<1x24x128xf32> to vector<24x128xf32>
    %c0_3 = arith.constant 0 : index
    %c0_4 = arith.constant 0 : index
    %c0_5 = arith.constant 0 : index
    %5 = vector.load %arg4[%c0_3, %c0_4, %c0_5] : memref<1x24x128xf32, #tpu.memory_space<vmem>>, vector<1x24x128xf32>
    %6 = vector.shape_cast %5 : vector<1x24x128xf32> to vector<24x128xf32>
    %7 = arith.subf %4, %6 : vector<24x128xf32>
    %8 = arith.mulf %7, %7 : vector<24x128xf32>
    %c1_i32 = arith.constant 1 : i32
    %9 = arith.muli %arg1, %c1_i32 : i32
    %10 = arith.addi %9, %arg2 : i32
    %c24_i32 = arith.constant 24 : i32
    %11 = arith.muli %10, %c24_i32 : i32
    %12 = tpu.iota {dimensions = array<i32: 0>} : vector<24x128xi32>
    %13 = vector.broadcast %11 : i32 to vector<24x128xi32>
    %14 = arith.addi %12, %13 : vector<24x128xi32>
    %c18_i32 = arith.constant 18 : i32
    %15 = vector.broadcast %c18_i32 : i32 to vector<24x128xi32>
    %16 = arith.cmpi slt, %14, %15 : vector<24x128xi32>
    %cst = arith.constant 0.000000e+00 : f32
    %17 = vector.broadcast %cst : f32 to vector<24x128xf32>
    %18 = arith.select %16, %8, %17 : vector<24x128xi1>, vector<24x128xf32>
    %19 = vector.shape_cast %18 : vector<24x128xf32> to vector<3x8x128xf32>
    %cst_6 = arith.constant dense<0.000000e+00> : vector<8x128xf32>
    %20 = vector.multi_reduction <add>, %19, %cst_6 [0] : vector<3x8x128xf32> to vector<8x128xf32>
    %c0_7 = arith.constant 0 : index
    %c0_8 = arith.constant 0 : index
    %c0_9 = arith.constant 0 : index
    %c0_10 = arith.constant 0 : index
    %21 = vector.load %arg5[%c0_7, %c0_8, %c0_9, %c0_10] : memref<1x1x8x128xf32, #tpu.memory_space<vmem>>, vector<1x1x8x128xf32>
    %22 = vector.shape_cast %20 : vector<8x128xf32> to vector<1x1x8x128xf32>
    %23 = arith.addf %21, %22 : vector<1x1x8x128xf32>
    %c0_11 = arith.constant 0 : index
    %c0_12 = arith.constant 0 : index
    %c0_13 = arith.constant 0 : index
    %c0_14 = arith.constant 0 : index
    %24 = vector.load %arg5[%c0_11, %c0_12, %c0_13, %c0_14] : memref<1x1x8x128xf32, #tpu.memory_space<vmem>>, vector<1x1x8x128xf32>
    tpu.vector_store %arg5[%c0_11, %c0_12, %c0_13, %c0_14], %23 {strides = array<i32>} : memref<1x1x8x128xf32, #tpu.memory_space<vmem>>, vector<1x1x8x128xf32>,
    return
  }
  func.func @transform_0(%arg0: i32, %arg1: i32, %arg2: i32) -> (i32, i32, i32) {
    %c1_i32 = arith.constant 1 : i32
    %0 = arith.muli %arg1, %c1_i32 : i32
    %1 = arith.addi %0, %arg2 : i32
    %c0_i32 = arith.constant 0 : i32
    %c0_i32_0 = arith.constant 0 : i32
    return %arg0, %1, %c0_i32 : i32, i32, i32
  }
  func.func @transform_1(%arg0: i32, %arg1: i32, %arg2: i32) -> (i32, i32, i32) {
    %c1_i32 = arith.constant 1 : i32
    %0 = arith.muli %arg1, %c1_i32 : i32
    %1 = arith.addi %0, %arg2 : i32
    %c0_i32 = arith.constant 0 : i32
    %c0_i32_0 = arith.constant 0 : i32
    return %arg0, %1, %c0_i32 : i32, i32, i32
  }
  func.func @transform_2(%arg0: i32, %arg1: i32, %arg2: i32) -> (i32, i32, i32, i32) {
    %c0_i32 = arith.constant 0 : i32
    %c0_i32_0 = arith.constant 0 : i32
    %c0_i32_1 = arith.constant 0 : i32
    return %arg0, %arg1, %c0_i32, %c0_i32_0 : i32, i32, i32, i32
  }
}

</mosaic_0001>

<llo_original>
// kernel: tpu_custom_call.1
$region0: #{tpu_custom_call.1}
  #allocation0 [shape = 'u32[]', space=smem, size = 0x4, offset = 0x4, fixed_abs, tag = 'smem constant byte address 0x4 - core index']
  #allocation1 [shape = 'u32[144,128]{1,0:T(1,128)}', space=vmem, size = 0x12000, scoped, tag = 'internal scratch']
  %s0 = inlined_call_operand.vmem [shape: f32[2,18,128], index: 0, kind: input, shape index: {}]
  %s1 = inlined_call_operand.vmem [shape: f32[2,18,128], index: 1, kind: input, shape index: {}]
  %s2 = inlined_call_operand.hbm [shape: f32[2,1,8,128], index: 2, kind: output, shape index: {}]
  %s3 = sld [smem:[#allocation0]]
  $region45: #{tpu_custom_call.1} parent=0
    _
  %s5 = ssub.s32 1, %s3
  %s6 = scalar_select 0, %s5, %s3
  $region1: #{tpu_custom_call.1} parent=0
    #allocation2 [shape = 'u8[8192]{0}', space=vmem, size = 0x2000, scoped, tag = 'output window, operand 0']
    #allocation3 [shape = 's32[2]{0}', space=sflag, size = 0x8, scoped, tag = 'scoped memory for tpu_custom_call.1']
    %7 = vsyncpa [#allocation3], 0
    %s8 = scalar_lea.sflag [#allocation3], 1
    %9 = vsyncpa %s8, 0
    loop: start=0, step=1, limit=4
    $region2: #{tpu_custom_call.1} parent=1 // loop_pre_header
      _
    $region3: #{tpu_custom_call.1} parent=1 // loop_header
      %s11 = sphi 0, %s15
      %p12 = scmp.ge.s32.totalorder %s11, 4
      %s18 = sphi 0, %s37
      %s19 = sphi 0, %s33
      %s20 = sphi 0, %s29
      %s21 = sphi 0, %s18
      %s22 = sphi 0, %s19
      %s23 = sphi 0, %s20
      %s24 = sphi 0, %s21
      %s25 = sphi 0, %s22
      %s26 = sphi 0, %s23
      %s44 = sphi 0, %s46
      %s47 = sphi 0, %s44
      %s48 = sphi 0, %s47
      %s64 = sphi 0, %s48
      %s74 = sphi 0, %s76
      %s77 = sphi 0, %s74
      %s78 = sphi 0, %s77
      %s94 = sphi 0, %s78
      %s102 = sphi 0, %s104
      %s105 = sphi 0, %s102
      %s106 = sphi 0, %s105
      %s122 = sphi 0, %s106
    $region4: #{tpu_custom_call.1} parent=1 // loop_header_branch
      %14 = sbr.rel (%p12) target = $region8
    $region5: #{tpu_custom_call.1} parent=1 // loop_body
      %s16 = ssub.s32 %s11, 1
      %s17 = ssub.s32 %s11, 2
      %s27 = sadd.s32 1, %s20
      %p28 = scmp.ge.s32.totalorder %s27, 1
      %s29 = scalar_select %p28, 0, %s27
      %s30 = sadd.s32 1, %s19
      %s31 = scalar_select %p28, %s30, %s19
      %p32 = scmp.ge.s32.totalorder %s31, 1
      %s33 = scalar_select %p32, 0, %s31
      %s34 = sadd.s32 1, %s18
      %s35 = scalar_select %p32, %s34, %s18
      %p36 = scmp.ge.s32.totalorder %s35, 2
      %s37 = scalar_select %p36, 0, %s35
      %s38 = sadd.s32 %s19, %s20
      %s39 = sadd.s32 %s33, %s29
      %s40 = ssub.s32 %s18, %s37
      %s41 = ssub.s32 %s38, %s39
      %s42 = sor.u32 %s40, %s41
      %p43 = scmp.eq.s32.totalorder %s42, 0
      %s45 = sadd.s32 %s44, 1
      %s46 = scalar_select %p43, %s44, %s45
      %p49 = pneg %p43
      %p50 = scmp.eq.s32.totalorder %s11, 1
      %p51 = por %p49, %p50
      %p52 = scmp.ne.s32.totalorder %s44, %s47
      %p53 = scmp.eq.s32.totalorder %s11, 0
      %p54 = por %p52, %p53
      %p55 = scmp.ne.s32.totalorder %s44, %s47
      %p56 = scmp.eq.s32.totalorder %s16, 1
      %p57 = por %p55, %p56
      %p58 = scmp.ne.s32.totalorder %s47, %s48
      %p59 = scmp.eq.s32.totalorder %s16, 0
      %p60 = por %p58, %p59
      %p61 = scmp.ne.s32.totalorder %s47, %s48
      %p62 = scmp.eq.s32.totalorder %s17, 1
      %p63 = por %p61, %p62
      %p65 = scmp.ne.s32.totalorder %s48, %s64
      %p66 = scmp.eq.s32.totalorder %s17, 0
      %p67 = por %p65, %p66
      %s68 = sadd.s32 %s19, %s20
      %s69 = sadd.s32 %s33, %s29
      %s70 = ssub.s32 %s18, %s37
      %s71 = ssub.s32 %s68, %s69
      %s72 = sor.u32 %s70, %s71
      %p73 = scmp.eq.s32.totalorder %s72, 0
      %s75 = sadd.s32 %s74, 1
      %s76 = scalar_select %p73, %s74, %s75
      %p79 = pneg %p73
      %p80 = scmp.eq.s32.totalorder %s11, 1
      %p81 = por %p79, %p80
      %p82 = scmp.ne.s32.totalorder %s74, %s77
      %p83 = scmp.eq.s32.totalorder %s11, 0
      %p84 = por %p82, %p83
      %p85 = scmp.ne.s32.totalorder %s74, %s77
      %p86 = scmp.eq.s32.totalorder %s16, 1
      %p87 = por %p85, %p86
      %p88 = scmp.ne.s32.totalorder %s77, %s78
      %p89 = scmp.eq.s32.totalorder %s16, 0
      %p90 = por %p88, %p89
      %p91 = scmp.ne.s32.totalorder %s77, %s78
      %p92 = scmp.eq.s32.totalorder %s17, 1
      %p93 = por %p91, %p92
      %p95 = scmp.ne.s32.totalorder %s78, %s94
      %p96 = scmp.eq.s32.totalorder %s17, 0
      %p97 = por %p95, %p96
      %s98 = ssub.s32 %s18, %s37
      %s99 = ssub.s32 %s19, %s33
      %s100 = sor.u32 %s98, %s99
      %p101 = scmp.eq.s32.totalorder %s100, 0
      %s103 = sadd.s32 %s102, 1
      %s104 = scalar_select %p101, %s102, %s103
      %p107 = pneg %p101
      %p108 = scmp.eq.s32.totalorder %s11, 1
      %p109 = por %p107, %p108
      %p110 = scmp.ne.s32.totalorder %s102, %s105
      %p111 = scmp.eq.s32.totalorder %s11, 0
      %p112 = por %p110, %p111
      %p113 = scmp.ne.s32.totalorder %s102, %s105
      %p114 = scmp.eq.s32.totalorder %s16, 1
      %p115 = por %p113, %p114
      %p116 = scmp.ne.s32.totalorder %s105, %s106
      %p117 = scmp.eq.s32.totalorder %s16, 0
      %p118 = por %p116, %p117
      %p119 = scmp.ne.s32.totalorder %s105, %s106
      %p120 = scmp.eq.s32.totalorder %s17, 1
      %p121 = por %p119, %p120
      %p123 = scmp.ne.s32.totalorder %s106, %s122
      %p124 = scmp.eq.s32.totalorder %s17, 0
      %p125 = por %p123, %p124
      %p126 = scmp.le.s32.totalorder 1, %s11
      %p127 = scmp.lt.s32.totalorder %s11, 3
      %p128 = pnand %p126, %p127
      %p129 = pneg %p128
      // Predicated region
      $region9: #{tpu_custom_call.1} parent=5 // pred_check
        _
      $region10: #{tpu_custom_call.1} parent=5 // pred_check_branch
        %131 = sbr.rel (%p128) target = $region12
      $region11: #{tpu_custom_call.1} parent=5 // pred_region
        %s132 = ssub.s32 %s11, 1
      $region12: #{tpu_custom_call.1} parent=5 // pred_fallthru
        _
      %p133 = scmp.lt.s32.totalorder %s11, 2
      // Predicated region
      $region13: #{tpu_custom_call.1} parent=5 // pred_check
        %p134 = pneg %p133
      $region14: #{tpu_custom_call.1} parent=5 // pred_check_branch
        %136 = sbr.rel (%p134) target = $region16
      $region15: #{tpu_custom_call.1} parent=5 // pred_region
        // Predicated region
        $region17: #{tpu_custom_call.1} parent=15 // pred_check
          %p137 = pneg %p54
        $region18: #{tpu_custom_call.1} parent=15 // pred_check_branch
          %139 = sbr.rel (%p137) target = $region20
        $region19: #{tpu_custom_call.1} parent=15 // pred_region
          %s140 = sadd.s32 %s19, %s20
          %s141 = smul.u32 3, %s140
          %p142 = scmp.lt.s32.totalorder %s18, 1
          %s143 = scalar_select %p142, %s18, 1
          %p144 = scmp.lt.s32.totalorder %s141, 2
          %s145 = scalar_select %p144, %s141, 2
          %s146 = smul.addr %s143, 3
          %s147 = sadd.s32 %s145, %s146
          %s148 = smul.addr %s147, 8
          %s149 = scalar_lea.vmem %s0, %s148
          %s150 = sadd.s32 %s19, %s20
          %s151 = smul.u32 3, %s150
        $region20: #{tpu_custom_call.1} parent=15 // pred_fallthru
          _
        // Predicated region
        $region21: #{tpu_custom_call.1} parent=15 // pred_check
          %p152 = pneg %p84
        $region22: #{tpu_custom_call.1} parent=15 // pred_check_branch
          %154 = sbr.rel (%p152) target = $region24
        $region23: #{tpu_custom_call.1} parent=15 // pred_region
          %s155 = sadd.s32 %s19, %s20
          %s156 = smul.u32 3, %s155
          %p157 = scmp.lt.s32.totalorder %s18, 1
          %s158 = scalar_select %p157, %s18, 1
          %p159 = scmp.lt.s32.totalorder %s156, 2
          %s160 = scalar_select %p159, %s156, 2
          %s161 = smul.addr %s158, 3
          %s162 = sadd.s32 %s160, %s161
          %s163 = smul.addr %s162, 8
          %s164 = scalar_lea.vmem %s1, %s163
          %s165 = sadd.s32 %s19, %s20
          %s166 = smul.u32 3, %s165
        $region24: #{tpu_custom_call.1} parent=15 // pred_fallthru
          _
      $region16: #{tpu_custom_call.1} parent=5 // pred_fallthru
        _
      %p167 = scmp.le.s32.totalorder 1, %s11
      %p168 = scmp.lt.s32.totalorder %s11, 3
      %p169 = pnand %p167, %p168
      %p170 = pneg %p169
      // Predicated region
      $region25: #{tpu_custom_call.1} parent=5 // pred_check
        _
      $region26: #{tpu_custom_call.1} parent=5 // pred_check_branch
        %172 = sbr.rel (%p169) target = $region28
      $region27: #{tpu_custom_call.1} parent=5 // pred_region
        %s173 = ssub.s32 %s11, 1
        %s174 = sadd.s32 %s22, %s23
        %s175 = smul.u32 3, %s174
        %p176 = scmp.lt.s32.totalorder %s21, 1
        %s177 = scalar_select %p176, %s21, 1
        %p178 = scmp.lt.s32.totalorder %s175, 2
        %s179 = scalar_select %p178, %s175, 2
        %s180 = smul.addr %s177, 3
        %s181 = sadd.s32 %s179, %s180
        %s182 = smul.addr %s181, 8
        %s183 = scalar_lea.vmem %s0, %s182
        %p184 = pneg %p60
        %p185 = pneg %p57
        %s186 = sadd.s32 %s22, %s23
        %s187 = smul.u32 3, %s186
        %p188 = scmp.lt.s32.totalorder %s21, 1
        %s189 = scalar_select %p188, %s21, 1
        %p190 = scmp.lt.s32.totalorder %s187, 2
        %s191 = scalar_select %p190, %s187, 2
        %s192 = smul.addr %s189, 3
        %s193 = sadd.s32 %s191, %s192
        %s194 = smul.addr %s193, 8
        %s195 = scalar_lea.vmem %s1, %s194
        %p196 = pneg %p90
        %p197 = pneg %p87
        %p198 = pneg %p118
        %p199 = pneg %p115
        %s200 = sand.u32 %s105, 1
        %s201 = scalar_lea.sflag [#allocation3], %s200
        %s202 = sand.u32 %s105, 1
        %s203 = smul.addr %s202, 8
        %s204 = scalar_lea.vmem [#allocation2], %s203
        %s205 = sadd.s32 %s22, %s23
        %s206 = smul.u32 3, %s205
        %p207 = scmp.lt.s32.totalorder %s21, 1
        %s208 = scalar_select %p207, %s21, 1
        %p209 = scmp.lt.s32.totalorder %s206, 2
        %s210 = scalar_select %p209, %s206, 2
        %s211 = smul.addr %s208, 3
        %s212 = sadd.s32 %s210, %s211
        %s213 = smul.addr %s212, 8
        %s214 = scalar_lea.vmem %s0, %s213
        %s215 = sadd.s32 %s22, %s23
        %s216 = smul.u32 3, %s215
        %s217 = sadd.s32 %s22, %s23
        %s218 = smul.u32 3, %s217
        %p219 = scmp.lt.s32.totalorder %s21, 1
        %s220 = scalar_select %p219, %s21, 1
        %p221 = scmp.lt.s32.totalorder %s218, 2
        %s222 = scalar_select %p221, %s218, 2
        %s223 = smul.addr %s220, 3
        %s224 = sadd.s32 %s222, %s223
        %s225 = smul.addr %s224, 8
        %s226 = scalar_lea.vmem %s1, %s225
        %s227 = sadd.s32 %s22, %s23
        %s228 = smul.u32 3, %s227
        %p229 = scmp.eq.s32.totalorder %s23, 0
        // Predicated region
        $region29: #{tpu_custom_call.1} parent=27 // pred_check
          %p230 = pneg %p229
        $region30: #{tpu_custom_call.1} parent=27 // pred_check_branch
          %232 = sbr.rel (%p230) target = $region32
        $region31: #{tpu_custom_call.1} parent=27 // pred_region
          %233 = vst [vmem:[%s204] sm:$0xff] 0.0
        $region32: #{tpu_custom_call.1} parent=27 // pred_fallthru
          _
        %v234 = vld [vmem:[%s214] sm:$0xff]
        %v235 = vld [vmem:[%s214 + $0x8] sm:$0xff]
        %v236 = vld [vmem:[%s214 + $0x10] sm:$0xff]
        %v237 = vld [vmem:[%s226] sm:$0xff]
        %v238 = vld [vmem:[%s226 + $0x8] sm:$0xff]
        %v239 = vld [vmem:[%s226 + $0x10] sm:$0xff]
        %v240 = vsub.f32 %v234, %v237
        %v241 = vsub.f32 %v235, %v238
        %v242 = vsub.f32 %v236, %v239
        %v243 = vmul.f32 %v240, %v240
        %v244 = vmul.f32 %v241, %v241
        %v245 = vmul.f32 %v242, %v242
        %s246 = sadd.s32 %s22, %s23
        %s247 = smul.u32 %s246, 24
        %v248 = vlaneseq
        %v249 = vshrl.u32 %v248, 7
        %v250 = vadd.s32 %v249, 8
        %v251 = vadd.s32 %v249, 16
        %v252 = vstv %s247
        %v253 = vadd.s32 %v249, %v252
        %v254 = vadd.s32 %v250, %v252
        %v255 = vadd.s32 %v251, %v252
        %vm256 = vcmp.lt.s32.totalorder %v253, 18
        %vm257 = vcmp.lt.s32.totalorder %v254, 18
        %vm258 = vcmp.lt.s32.totalorder %v255, 18
        %v259 = vsel %vm256, %v243, 0.0
        %v260 = vsel %vm257, %v244, 0.0
        %v261 = vsel %vm258, %v245, 0.0
        %v262 = vadd.f32 %v259, %v260
        %v263 = vadd.f32 %v262, %v261
        %v264 = vld [vmem:[%s204] sm:$0xff]
        %v265 = vadd.f32 %v264, %v263
        %266 = vst [vmem:[%s204] sm:$0xff] %v265
        %s267 = sand.u32 %s105, 1
        %s268 = scalar_lea.sflag [#allocation3], %s267
        %s269 = sand.u32 %s105, 1
        %s270 = smul.addr %s269, 8
        %s271 = scalar_lea.vmem [#allocation2], %s270
        // Predicated region
        $region33: #{tpu_custom_call.1} parent=27 // pred_check
          %p272 = pneg %p115
        $region34: #{tpu_custom_call.1} parent=27 // pred_check_branch
          %274 = sbr.rel (%p272) target = $region36
        $region35: #{tpu_custom_call.1} parent=27 // pred_region
          %s276 = ssub.s32 128, 128
          %277 = vsyncadd %s268, %s276
          %s278 = sadd.s32 %s22, %s21
          %s279 = smul.addr %s278, 128
          %s280 = scalar_lea.hbm %s2, %s279
          %s282 = sshll.u32 %s271, 4
          %s283 = int_to_ptr.vmem [resolvable:$true] %s282
          %285 = dma.vmem_to_hbm [thread:$0]  %s283, 128, %s280, %s268
        $region36: #{tpu_custom_call.1} parent=27 // pred_fallthru
          _
      $region28: #{tpu_custom_call.1} parent=5 // pred_fallthru
        _
      %p286 = scmp.le.s32.totalorder 2, %s11
      // Predicated region
      $region37: #{tpu_custom_call.1} parent=5 // pred_check
        %p287 = pneg %p286
      $region38: #{tpu_custom_call.1} parent=5 // pred_check_branch
        %289 = sbr.rel (%p287) target = $region40
      $region39: #{tpu_custom_call.1} parent=5 // pred_region
        %s290 = ssub.s32 %s11, 2
        // Predicated region
        $region41: #{tpu_custom_call.1} parent=39 // pred_check
          %p291 = pneg %p121
        $region42: #{tpu_custom_call.1} parent=39 // pred_check_branch
          %293 = sbr.rel (%p291) target = $region44
        $region43: #{tpu_custom_call.1} parent=39 // pred_region
          %s294 = sand.u32 %s106, 1
          %s295 = scalar_lea.sflag [#allocation3], %s294
          %s296 = sand.u32 %s106, 1
          %s297 = smul.addr %s296, 8
          %s298 = scalar_lea.vmem [#allocation2], %s297
          %299 = dma.done %s295, 128
        $region44: #{tpu_custom_call.1} parent=39 // pred_fallthru
          _
      $region40: #{tpu_custom_call.1} parent=5 // pred_fallthru
        _
    $region6: #{tpu_custom_call.1} parent=1 // loop_footer
      %s15 = sadd.s32 1, %s11
    $region7: #{tpu_custom_call.1} parent=1 // loop_footer_branch
      %10 = sbr.rel target = $region3
    $region8: #{tpu_custom_call.1} parent=1 // loop_exit
      _
    %300 = vsyncpa [#allocation3], 1
    %s301 = scalar_lea.sflag [#allocation3], 1
    %302 = vsyncpa %s301, 1

</llo_original>
